<compile_context>
chip_gen: v7x
topology: tpu7x:2x2x1
jax: 0.10.0
libtpu: 0.0.40
codegen_flags: <defaults>
</compile_context>

<pallas_src>
import jax
import jax.numpy as jnp
from jax.experimental import pallas as pl
from jax.experimental.pallas import tpu as pltpu

LANE = 128
SUBLANE = 8


# ----------------------------------------------------------------------------
# Small helpers
# ----------------------------------------------------------------------------
def _round_up(x, m):
    return ((x + m - 1) // m) * m


def _pad2(a, rows, cols):
    return jnp.pad(a, ((0, rows - a.shape[0]), (0, cols - a.shape[1])))


def _vmem_limit_bytes():
    """Generation-aware scoped-VMEM request (~75% of physical VMEM)."""
    cap = 128 * 1024 * 1024
    try:
        info = pltpu.get_tpu_info()
        cap = int(getattr(info, "vmem_capacity_bytes", cap) or cap)
    except Exception:  # pragma: no cover - interpret mode / AOT on CPU etc.
        pass
    return int(cap) * 3 // 4


def _choose_tiling(n):
    """Padded N and square tile size for the A_hat passes.

    Pads N only to a multiple of 128, then picks the largest tile in
    {1024, 512, 256, 128} whose extra padding stays under ~12% (A_hat's HBM
    traffic scales with n_pad^2, so padding waste multiplies quadratically).
    """
    n128 = _round_up(max(n, LANE), LANE)
    if n128 <= 1024:
        return n128, n128                       # single block: no grid overhead
    for blk in (1024, 512, 256, 128):
        n_pad = _round_up(n128, blk)
        if (n_pad - n128) <= n128 // 8:
            return n_pad, blk
    return n128, LANE


# ----------------------------------------------------------------------------
# Pallas kernels
# ----------------------------------------------------------------------------
def _feat_transform_kernel(x_ref, w_ref, out_ref):
    # T1 = X @ W1, stored bf16 (halves HBM traffic of the streamed operand).
    out_ref[...] = jnp.dot(
        x_ref[...], w_ref[...], preferred_element_type=jnp.float32
    ).astype(out_ref.dtype)


def _make_layer1_kernel(tk, t_resident):
    """out = ReLU(A_hat @ T1 + b1) @ W2, tiled over (row block i, k block k)."""

    def kernel(a_ref, t1_ref, b1_ref, w2_ref, out_ref, acc_ref):
        k = pl.program_id(1)

        @pl.when(k == 0)
        def _():
            acc_ref[...] = jnp.zeros_like(acc_ref)

        if t_resident:
            # T1 is VMEM-resident (constant block index -> DMA'd once);
            # slice the current k block locally.
            start = pl.multiple_of(k * tk, tk)
            t_blk = t1_ref[pl.ds(start, tk), :]
        else:
            t_blk = t1_ref[...]

        acc_ref[...] += jnp.dot(
            a_ref[...], t_blk, preferred_element_type=jnp.float32)

        @pl.when(k == pl.num_programs(1) - 1)
        def _():
            h1 = jnp.maximum(acc_ref[...] + b1_ref[...], 0.0)
            # bf16 x bf16 epilogue matmul, f32 accumulation (layer-2 feature
            # transform fused here so h1 never round-trips to HBM).
            out_ref[...] = jnp.dot(
                h1.astype(w2_ref.dtype), w2_ref[...],
                preferred_element_type=jnp.float32,
            ).astype(out_ref.dtype)

    return kernel


def _make_layer2_kernel(tk, t_resident):
    """h2 = A_hat @ T2 + b2 ; partial_pool[i] = Pool_blk @ h2_blk.

    No cross-row-block state, so the row axis may be 'parallel' (v7x megacore).
    """

    def kernel(a_ref, t2_ref, b2_ref, pool_ref, out_ref, acc_ref):
        k = pl.program_id(1)

        @pl.when(k == 0)
        def _():
            acc_ref[...] = jnp.zeros_like(acc_ref)

        if t_resident:
            start = pl.multiple_of(k * tk, tk)
            t_blk = t2_ref[pl.ds(start, tk), :]
        else:
            t_blk = t2_ref[...]

        acc_ref[...] += jnp.dot(
            a_ref[...], t_blk, preferred_element_type=jnp.float32)

        @pl.when(k == pl.num_programs(1) - 1)
        def _():
            h2 = acc_ref[...] + b2_ref[...]
            out_ref[...] = jnp.dot(
                pool_ref[...], h2, preferred_element_type=jnp.float32
            )[None, :, :]

    return kernel


# ----------------------------------------------------------------------------
# pallas_call wrappers
# ----------------------------------------------------------------------------
def _feature_transform(x_pad, w_pad, tm, vmem_limit):
    n_pad, fp = x_pad.shape
    pp = w_pad.shape[1]
    return pl.pallas_call(
        _feat_transform_kernel,
        out_shape=jax.ShapeDtypeStruct((n_pad, pp), jnp.bfloat16),
        grid_spec=pltpu.PrefetchScalarGridSpec(
            num_scalar_prefetch=0, grid=(n_pad // tm,),
            in_specs=[pl.BlockSpec((tm, fp), lambda i: (i, 0)),
                      pl.BlockSpec((fp, pp), lambda i: (0, 0))],
            out_specs=pl.BlockSpec((tm, pp), lambda i: (i, 0))),
        compiler_params=pltpu.CompilerParams(
            dimension_semantics=("parallel",),
            vmem_limit_bytes=vmem_limit),
    )(x_pad, w_pad)


def _gcn_layer1(a_bf16, t1_bf16, b1_pad, w2_bf16, blk, t_resident, vmem_limit):
    n_pad = a_bf16.shape[0]
    pp = t1_bf16.shape[1]
    hp = w2_bf16.shape[1]
    nblk = n_pad // blk
    if t_resident:
        t1_spec = pl.BlockSpec((n_pad, pp), lambda i, k: (0, 0))  # DMA'd once
    else:
        t1_spec = pl.BlockSpec((blk, pp), lambda i, k: (k, 0))    # streamed
    return pl.pallas_call(
        _make_layer1_kernel(blk, t_resident),
        out_shape=jax.ShapeDtypeStruct((n_pad, hp), jnp.bfloat16),
        grid_spec=pltpu.PrefetchScalarGridSpec(
            num_scalar_prefetch=0, grid=(nblk, nblk),
            in_specs=[pl.BlockSpec((blk, blk), lambda i, k: (i, k)),   # A_hat
                      t1_spec,                                         # T1
                      pl.BlockSpec((1, pp), lambda i, k: (0, 0)),      # b1
                      pl.BlockSpec((pp, hp), lambda i, k: (0, 0))],    # W2 bf16
            out_specs=pl.BlockSpec((blk, hp), lambda i, k: (i, 0)),    # T2
            scratch_shapes=[pltpu.VMEM((blk, pp), jnp.float32)]),
        compiler_params=pltpu.CompilerParams(
            dimension_semantics=("parallel", "arbitrary"),
            vmem_limit_bytes=vmem_limit),
    )(a_bf16, t1_bf16, b1_pad, w2_bf16)


def _gcn_layer2_pool(a_bf16, t2_bf16, b2_pad, pool_pad, blk, t_resident,
                     vmem_limit):
    n_pad = a_bf16.shape[0]
    hp = t2_bf16.shape[1]
    gp = pool_pad.shape[0]
    nblk = n_pad // blk
    if t_resident:
        t2_spec = pl.BlockSpec((n_pad, hp), lambda i, k: (0, 0))
    else:
        t2_spec = pl.BlockSpec((blk, hp), lambda i, k: (k, 0))
    return pl.pallas_call(
        _make_layer2_kernel(blk, t_resident),
        out_shape=jax.ShapeDtypeStruct((nblk, gp, hp), jnp.float32),
        grid_spec=pltpu.PrefetchScalarGridSpec(
            num_scalar_prefetch=0, grid=(nblk, nblk),
            in_specs=[pl.BlockSpec((blk, blk), lambda i, k: (i, k)),   # A_hat
                      t2_spec,                                         # T2
                      pl.BlockSpec((1, hp), lambda i, k: (0, 0)),      # b2
                      pl.BlockSpec((gp, blk), lambda i, k: (0, i))],   # pool
            out_specs=pl.BlockSpec((1, gp, hp), lambda i, k: (i, 0, 0)),
            scratch_shapes=[pltpu.VMEM((blk, hp), jnp.float32)]),
        compiler_params=pltpu.CompilerParams(
            dimension_semantics=("parallel", "arbitrary"),
            vmem_limit_bytes=vmem_limit),
    )(a_bf16, t2_bf16, b2_pad, pool_pad)


# ----------------------------------------------------------------------------
# Glue (plain JAX): graph preprocessing + parameter init
# ----------------------------------------------------------------------------
def build_gcn_adj(edge_index, edge_weight, num_nodes):
    """Dense symmetrically-normalized adjacency with self-loops (gcn_norm)."""
    src, dst = edge_index[0], edge_index[1]
    if edge_weight is None:
        edge_weight = jnp.ones(src.shape[0], dtype=jnp.float32)
    A = jnp.zeros((num_nodes, num_nodes), jnp.float32)
    A = A.at[dst, src].add(edge_weight)            # message: src -> dst
    idx = jnp.arange(num_nodes)
    A = A.at[idx, idx].add(1.0)                    # self loops, weight 1
    deg = A.sum(axis=1)
    dinv = jnp.where(deg > 0, 1.0 / jnp.sqrt(deg), 0.0)
    return dinv[:, None] * A * dinv[None, :]


def build_gcn_adj_padded_bf16(edge_index, edge_weight, num_nodes, n_pad):
    """gcn_norm adjacency built directly at padded size, cast to bf16 once.

    Padded rows/cols get zero degree -> zero rows/cols, so padded nodes never
    contribute.  Avoids the old build(f32) -> pad -> cast triple N^2 pass.
    """
    src, dst = edge_index[0], edge_index[1]
    if edge_weight is None:
        edge_weight = jnp.ones(src.shape[0], dtype=jnp.float32)
    A = jnp.zeros((n_pad, n_pad), jnp.float32)
    A = A.at[dst, src].add(edge_weight)
    idx = jnp.arange(num_nodes)
    A = A.at[idx, idx].add(1.0)
    deg = A.sum(axis=1)
    dinv = jnp.where(deg > 0, 1.0 / jnp.sqrt(deg), 0.0)
    return (dinv[:, None] * A * dinv[None, :]).astype(jnp.bfloat16)


def build_pool_matrix(batch, num_graphs, num_nodes):
    """(G, N) matrix so that pool @ H == global_mean_pool(H, batch)."""
    if batch is None:
        return jnp.full((1, num_nodes), 1.0 / num_nodes, dtype=jnp.float32)
    onehot = (batch[None, :] == jnp.arange(num_graphs)[:, None]).astype(jnp.float32)
    counts = onehot.sum(axis=1, keepdims=True)
    return onehot / jnp.maximum(counts, 1.0)


def glorot(key, shape):
    fan_in, fan_out = shape
    limit = jnp.sqrt(6.0 / (fan_in + fan_out))
    return jax.random.uniform(key, shape, jnp.float32, -limit, limit)


def init_params(key, input_dim, proj_dim, hidden_dim):
    k1, k2, k3, k4 = jax.random.split(key, 4)
    return dict(
        w1=glorot(k1, (input_dim, proj_dim)),       # GCNConv1 weight
        b1=jnp.zeros((1, proj_dim), jnp.float32),   # GCNConv1 bias
        w2=glorot(k2, (proj_dim, hidden_dim)),      # GCNConv2 weight
        b2=jnp.zeros((1, hidden_dim), jnp.float32), # GCNConv2 bias
        # NOTE: torch nn.Linear stores (out, in); wfc here is the (in, out)
        # transposed matrix.  Real torch weights must be transposed on load.
        wfc=glorot(k3, (hidden_dim, hidden_dim)),
        bfc=jax.random.uniform(k4, (1, hidden_dim), jnp.float32,
                               -1.0 / jnp.sqrt(hidden_dim),
                               1.0 / jnp.sqrt(hidden_dim)),
    )


# ----------------------------------------------------------------------------
# Forward wrapper
# ----------------------------------------------------------------------------
def unsupervised_model_forward(params, x, edge_index, edge_weight=None,
                               batch=None, num_graphs=1):
    n, f = x.shape
    p = params["w1"].shape[1]
    h = params["w2"].shape[1]
    g = num_graphs if batch is not None else 1

    n_pad, blk = _choose_tiling(n)
    fp = _round_up(f, LANE)
    pp = _round_up(p, LANE)
    hp = _round_up(h, LANE)
    gp = _round_up(g, SUBLANE)

    vmem_limit = _vmem_limit_bytes()
    # Keep T1/T2 VMEM-resident across the whole A_hat pass when they fit
    # (removes the per-row-block re-stream, ~1/3 of HBM bytes); otherwise
    # fall back to streaming them per k block.
    t_resident = n_pad * max(pp, hp) * 2 <= vmem_limit // 3

    # Zero-padding is semantics-preserving: padded A rows/cols are zero so
    # padded nodes never contribute; padded pool rows/cols are zero.
    a_bf16 = build_gcn_adj_padded_bf16(edge_index, edge_weight, n, n_pad)
    pool = _pad2(build_pool_matrix(batch, g, n), gp, n_pad)

    x_pad = _pad2(x, n_pad, fp)
    w1 = _pad2(params["w1"], fp, pp)
    b1 = _pad2(params["b1"], 1, pp)
    w2 = _pad2(params["w2"], pp, hp).astype(jnp.bfloat16)
    b2 = _pad2(params["b2"], 1, hp)
    wfc = _pad2(params["wfc"], hp, hp)
    bfc = _pad2(params["bfc"], 1, hp)

    t1 = _feature_transform(x_pad, w1, blk, vmem_limit)            # (Np, Pp) bf16
    t2 = _gcn_layer1(a_bf16, t1, b1, w2, blk, t_resident, vmem_limit)  # bf16
    partial = _gcn_layer2_pool(a_bf16, t2, b2, pool, blk, t_resident,
                               vmem_limit)                         # (ni, Gp, Hp)

    # Tiny epilogue in plain JAX: reduce per-row-block partial pools, then fc.
    pooled = partial.sum(axis=0)                                   # (Gp, Hp) f32
    out = pooled @ wfc + bfc
    return out[:g, :h]


# ----------------------------------------------------------------------------
# Pure-JAX references for correctness checking
# ----------------------------------------------------------------------------
def reference_forward(params, x, edge_index, edge_weight=None,
                      batch=None, num_graphs=1):
    n = x.shape[0]
    g = num_graphs if batch is not None else 1
    a = build_gcn_adj(edge_index, edge_weight, n)
    pool = build_pool_matrix(batch, g, n)
    h1 = jnp.maximum(a @ (x @ params["w1"]) + params["b1"], 0.0)
    h2 = a @ (h1 @ params["w2"]) + params["b2"]
    return pool @ h2 @ params["wfc"] + params["bfc"]


def reference_forward_bf16_mirror(params, x, edge_index, edge_weight=None,
                                  batch=None, num_graphs=1):
    """Mirrors the kernel's bf16 storage of A_hat / T1 / T2 / W2 (f32 accum)."""
    n = x.shape[0]
    g = num_graphs if batch is not None else 1
    bf = lambda v: v.astype(jnp.bfloat16).astype(jnp.float32)
    a = bf(build_gcn_adj(edge_index, edge_weight, n))
    pool = build_pool_matrix(batch, g, n)
    t1 = bf(x @ params["w1"])
    h1 = jnp.maximum(a @ t1 + params["b1"], 0.0)
    t2 = bf(bf(h1) @ bf(params["w2"]))
    h2 = a @ t2 + params["b2"]
    return pool @ h2 @ params["wfc"] + params["bfc"]


if __name__ == "__main__":
    # Small shapes consistent with the module (GCN arch).
    input_dim, proj_dim, hidden_dim = 16, 32, 32
    num_graphs, nodes_per_graph = 2, 8
    num_nodes = num_graphs * nodes_per_graph

    key = jax.random.PRNGKey(0)
    kx, kw, ke = jax.random.split(key, 3)

    # Node features.
    x = jax.random.normal(kx, (num_nodes, input_dim), jnp.float32)

    # Deterministic ring graph inside each of the 2 graphs (edges both ways).
    srcs, dsts = [], []
    for gidx in range(num_graphs):
        base = gidx * nodes_per_graph
        for i in range(nodes_per_graph):
            a, b = base + i, base + (i + 1) % nodes_per_graph
            srcs += [a, b]
            dsts += [b, a]
    edge_index = jnp.array([srcs, dsts], dtype=jnp.int32)
    edge_weight = jax.random.uniform(ke, (edge_index.shape[1],), jnp.float32,
                                     0.5, 1.5)

    # Graph assignment vector for global_mean_pool.
    batch = jnp.repeat(jnp.arange(num_graphs, dtype=jnp.int32), nodes_per_graph)

    params = init_params(kw, input_dim, proj_dim, hidden_dim)

    out = unsupervised_model_forward(params, x, edge_index, edge_weight,
                                     batch=batch, num_graphs=num_graphs)
    out = jax.block_until_ready(out)

    ref_mirror = reference_forward_bf16_mirror(params, x, edge_index,
                                               edge_weight, batch=batch,
                                               num_graphs=num_graphs)
    ref_f32 = reference_forward(params, x, edge_index, edge_weight,
                                batch=batch, num_graphs=num_graphs)

    assert out.shape == (num_graphs, hidden_dim)
    # Tight structural check against the bf16-mirrored reference.
    assert jnp.allclose(out, ref_mirror, atol=2e-2, rtol=2e-2)
    # Loose sanity check against the pure-f32 module reference.
    assert jnp.allclose(out, ref_f32, atol=1e-1, rtol=1e-1)

    print("KERNEL_OK")
</pallas_src>

<mosaic_0001>
module attributes {stable_mosaic.version = 11 : i64} {
  func.func @_feat_transform_kernel(%arg0: i32, %arg1: memref<128x128xf32, #tpu.memory_space<vmem>>, %arg2: memref<128x128xf32, #tpu.memory_space<vmem>>, %arg3: memref<128x128xbf16, #tpu.memory_space<vmem>>) attributes {dimension_semantics = [#tpu.dimension_semantics<parallel>], iteration_bounds = array<i64: 1>, scalar_prefetch = 0 : i64, scratch_operands = 0 : i64, tpu.core_type = #tpu.core_type<tc>, window_params = [{transform_indices = @transform_0, window_bounds = array<i64: 128, 128>}, {pipeline_mode = #tpu.pipeline_mode<synchronous>, transform_indices = @transform_1, window_bounds = array<i64: 128, 128>}, {transform_indices = @transform_2, window_bounds = array<i64: 128, 128>}]} {
    %c0 = arith.constant 0 : index
    %c0_0 = arith.constant 0 : index
    %0 = vector.load %arg1[%c0, %c0_0] : memref<128x128xf32, #tpu.memory_space<vmem>>, vector<128x128xf32>
    %c0_1 = arith.constant 0 : index
    %c0_2 = arith.constant 0 : index
    %1 = vector.load %arg2[%c0_1, %c0_2] : memref<128x128xf32, #tpu.memory_space<vmem>>, vector<128x128xf32>
    %cst = arith.constant dense<0.000000e+00> : vector<128x128xf32>
    %2 = tpu.matmul %0, %1, %cst {dimension_numbers = #tpu.dot_dimension_numbers<[1], [0], [0], [1], [0, 0, 1, 1], [], []>} : vector<128x128xf32>, vector<128x128xf32>, vector<128x128xf32> -> vector<128x128xf32>
    %3 = arith.truncf %2 : vector<128x128xf32> to vector<128x128xbf16>
    %c0_3 = arith.constant 0 : index
    %c0_4 = arith.constant 0 : index
    %4 = vector.load %arg3[%c0_3, %c0_4] : memref<128x128xbf16, #tpu.memory_space<vmem>>, vector<128x128xbf16>
    tpu.vector_store %arg3[%c0_3, %c0_4], %3 {strides = array<i32>} : memref<128x128xbf16, #tpu.memory_space<vmem>>, vector<128x128xbf16>,
    return
  }
  func.func @transform_0(%arg0: i32) -> (i32, i32) {
    %c0_i32 = arith.constant 0 : i32
    %c0_i32_0 = arith.constant 0 : i32
    return %arg0, %c0_i32 : i32, i32
  }
  func.func @transform_1(%arg0: i32) -> (i32, i32) {
    %c0_i32 = arith.constant 0 : i32
    %c0_i32_0 = arith.constant 0 : i32
    %c0_i32_1 = arith.constant 0 : i32
    return %c0_i32, %c0_i32_0 : i32, i32
  }
  func.func @transform_2(%arg0: i32) -> (i32, i32) {
    %c0_i32 = arith.constant 0 : i32
    %c0_i32_0 = arith.constant 0 : i32
    return %arg0, %c0_i32 : i32, i32
  }
}

</mosaic_0001>

<llo_original>
// kernel: tpu_custom_call.1
$region0: #{tpu_custom_call.1}
  #allocation0 [shape = 'u32[]', space=smem, size = 0x4, offset = 0x4, fixed_abs, tag = 'smem constant byte address 0x4 - core index']
  #allocation1 [shape = 'u32[144,128]{1,0:T(1,128)}', space=vmem, size = 0x12000, scoped, tag = 'internal scratch']
  %s0 = inlined_call_operand.hbm [shape: f32[128,128], index: 0, kind: input, shape index: {}]
  %s1 = inlined_call_operand.hbm [shape: f32[128,128], index: 1, kind: input, shape index: {}]
  %s2 = inlined_call_operand.hbm [shape: bf16[128,128], index: 2, kind: output, shape index: {}]
  %s3 = sld [smem:[#allocation0]]
  $region26: #{tpu_custom_call.1} parent=0
    _
  %s5 = ssub.s32 1, %s3
  %s6 = scalar_select 0, %s5, %s3
  $region1: #{tpu_custom_call.1} parent=0
    #allocation2 [shape = 'u8[65536]{0}', space=vmem, size = 0x10000, scoped, tag = 'input window, operand 0, single buffered']
    #allocation3 [shape = 's32[1]{0}', space=sflag, size = 0x4, scoped, tag = 'scoped memory for tpu_custom_call.1']
    #allocation4 [shape = 's32[1]{0}', space=sflag, size = 0x4, scoped, tag = 'scoped memory for tpu_custom_call.1']
    #allocation5 [shape = 'u8[65536]{0}', space=vmem, size = 0x10000, scoped, tag = 'input window, operand 1, single buffered']
    #allocation6 [shape = 's32[1]{0}', space=sflag, size = 0x4, scoped, tag = 'scoped memory for tpu_custom_call.1']
    #allocation7 [shape = 'u8[32768]{0}', space=vmem, size = 0x8000, scoped, tag = 'output window, operand 0, single buffered']
    %7 = vsyncpa [#allocation3], 0
    %8 = vsyncpa [#allocation6], 0
    %9 = vsyncpa [#allocation4], 0
    // Predicated region
    $region2: #{tpu_custom_call.1} parent=1 // pred_check
      _
    $region3: #{tpu_custom_call.1} parent=1 // pred_check_branch
      %11 = sbr.rel (0) target = $region5
    $region4: #{tpu_custom_call.1} parent=1 // pred_region
      %s13 = ssub.s32 2048, 2048
      %14 = vsyncadd [#allocation3], %s13
      %s15 = sshll.u32 [#allocation2], 4
      %s16 = int_to_ptr.vmem [resolvable:$true] %s15
      %21 = dma.hbm_to_vmem [thread:$0]  %s0, 2048, %s16, [#allocation3], 128, 128, 8
    $region5: #{tpu_custom_call.1} parent=1 // pred_fallthru
      _
    // Predicated region
    $region6: #{tpu_custom_call.1} parent=1 // pred_check
      _
    $region7: #{tpu_custom_call.1} parent=1 // pred_check_branch
      %23 = sbr.rel (0) target = $region9
    $region8: #{tpu_custom_call.1} parent=1 // pred_region
      %s25 = ssub.s32 2048, 2048
      %26 = vsyncadd [#allocation6], %s25
      %s27 = sshll.u32 [#allocation5], 4
      %s28 = int_to_ptr.vmem [resolvable:$true] %s27
      %33 = dma.hbm_to_vmem [thread:$0]  %s1, 2048, %s28, [#allocation6], 128, 128, 8
    $region9: #{tpu_custom_call.1} parent=1 // pred_fallthru
      _
    // Predicated region
    $region10: #{tpu_custom_call.1} parent=1 // pred_check
      _
    $region11: #{tpu_custom_call.1} parent=1 // pred_check_branch
      %35 = sbr.rel (0) target = $region13
    $region12: #{tpu_custom_call.1} parent=1 // pred_region
      %36 = dma.done [#allocation3], 2048
    $region13: #{tpu_custom_call.1} parent=1 // pred_fallthru
      _
    // Predicated region
    $region14: #{tpu_custom_call.1} parent=1 // pred_check
      _
    $region15: #{tpu_custom_call.1} parent=1 // pred_check_branch
      %38 = sbr.rel (0) target = $region17
    $region16: #{tpu_custom_call.1} parent=1 // pred_region
      %39 = dma.done [#allocation6], 2048
    $region17: #{tpu_custom_call.1} parent=1 // pred_fallthru
      _
    %v40 = vld [vmem:[#allocation2] sm:$0xff]
    %v41 = vld [vmem:[#allocation2 + $0x8] sm:$0xff]
    %v42 = vld [vmem:[#allocation2 + $0x10] sm:$0xff]
    %v43 = vld [vmem:[#allocation2 + $0x18] sm:$0xff]
    %v44 = vld [vmem:[#allocation2 + $0x20] sm:$0xff]
    %v45 = vld [vmem:[#allocation2 + $0x28] sm:$0xff]
    %v46 = vld [vmem:[#allocation2 + $0x30] sm:$0xff]
    %v47 = vld [vmem:[#allocation2 + $0x38] sm:$0xff]
    %v48 = vld [vmem:[#allocation2 + $0x40] sm:$0xff]
    %v49 = vld [vmem:[#allocation2 + $0x48] sm:$0xff]
    %v50 = vld [vmem:[#allocation2 + $0x50] sm:$0xff]
    %v51 = vld [vmem:[#allocation2 + $0x58] sm:$0xff]
    %v52 = vld [vmem:[#allocation2 + $0x60] sm:$0xff]
    %v53 = vld [vmem:[#allocation2 + $0x68] sm:$0xff]
    %v54 = vld [vmem:[#allocation2 + $0x70] sm:$0xff]
    %v55 = vld [vmem:[#allocation2 + $0x78] sm:$0xff]
    %v56 = vld [vmem:[#allocation5] sm:$0xff]
    %v57 = vld [vmem:[#allocation5 + $0x8] sm:$0xff]
    %v58 = vld [vmem:[#allocation5 + $0x10] sm:$0xff]
    %v59 = vld [vmem:[#allocation5 + $0x18] sm:$0xff]
    %v60 = vld [vmem:[#allocation5 + $0x20] sm:$0xff]
    %v61 = vld [vmem:[#allocation5 + $0x28] sm:$0xff]
    %v62 = vld [vmem:[#allocation5 + $0x30] sm:$0xff]
    %v63 = vld [vmem:[#allocation5 + $0x38] sm:$0xff]
    %v64 = vld [vmem:[#allocation5 + $0x40] sm:$0xff]
    %v65 = vld [vmem:[#allocation5 + $0x48] sm:$0xff]
    %v66 = vld [vmem:[#allocation5 + $0x50] sm:$0xff]
    %v67 = vld [vmem:[#allocation5 + $0x58] sm:$0xff]
    %v68 = vld [vmem:[#allocation5 + $0x60] sm:$0xff]
    %v69 = vld [vmem:[#allocation5 + $0x68] sm:$0xff]
    %v70 = vld [vmem:[#allocation5 + $0x70] sm:$0xff]
    %v71 = vld [vmem:[#allocation5 + $0x78] sm:$0xff]
    %72 = vmatprep.subr.mxu0 0.0
    %73 = vmatpush1.msra.mxu0 %v56
    %74 = vmatprep.subr.mxu0 0.0
    %75 = vmatpush1.msra.mxu0 %v57
    %76 = vmatprep.subr.mxu0 0.0
    %77 = vmatpush1.msra.mxu0 %v58
    %78 = vmatprep.subr.mxu0 0.0
    %79 = vmatpush1.msra.mxu0 %v59
    %80 = vmatprep.subr.mxu0 0.0
    %81 = vmatpush1.msra.mxu0 %v60
    %82 = vmatprep.subr.mxu0 0.0
    %83 = vmatpush1.msra.mxu0 %v61
    %84 = vmatprep.subr.mxu0 0.0
    %85 = vmatpush1.msra.mxu0 %v62
    %86 = vmatprep.subr.mxu0 0.0
    %87 = vmatpush1.msra.mxu0 %v63
    %88 = vmatprep.subr.mxu0 0.0
    %89 = vmatpush1.msra.mxu0 %v64
    %90 = vmatprep.subr.mxu0 0.0
    %91 = vmatpush1.msra.mxu0 %v65
    %92 = vmatprep.subr.mxu0 0.0
    %93 = vmatpush1.msra.mxu0 %v66
    %94 = vmatprep.subr.mxu0 0.0
    %95 = vmatpush1.msra.mxu0 %v67
    %96 = vmatprep.subr.mxu0 0.0
    %97 = vmatpush1.msra.mxu0 %v68
    %98 = vmatprep.subr.mxu0 0.0
    %99 = vmatpush1.msra.mxu0 %v69
    %100 = vmatprep.subr.mxu0 0.0
    %101 = vmatpush1.msra.mxu0 %v70
    %102 = vmatprep.subr.mxu0 0.0
    %103 = vmatpush1.msra.mxu0 %v71
    %104 = vmatprep.subr.mxu0 0.0
    %105 = vmatpush1.msra.mxu0 0.0
    %106 = vmatprep.subr.mxu0 0.0
    %107 = vmatpush1.msra.mxu0 0.0
    %108 = vmatprep.subr.mxu0 0.0
    %109 = vmatpush1.msra.mxu0 0.0
    %110 = vmatprep.subr.mxu0 0.0
    %111 = vmatpush1.msra.mxu0 0.0
    %112 = vmatprep.subr.mxu0 0.0
    %113 = vmatpush1.msra.mxu0 0.0
    %114 = vmatprep.subr.mxu0 0.0
    %115 = vmatpush1.msra.mxu0 0.0
    %116 = vmatprep.subr.mxu0 0.0
    %117 = vmatpush1.msra.mxu0 0.0
    %118 = vmatprep.subr.mxu0 0.0
    %119 = vmatpush1.msra.mxu0 0.0
    %120 = vmatprep.subr.mxu0 0.0
    %121 = vmatpush1.msra.mxu0 0.0
    %122 = vmatprep.subr.mxu0 0.0
    %123 = vmatpush1.msra.mxu0 0.0
    %124 = vmatprep.subr.mxu0 0.0
    %125 = vmatpush1.msra.mxu0 0.0
    %126 = vmatprep.subr.mxu0 0.0
    %127 = vmatpush1.msra.mxu0 0.0
    %128 = vmatprep.subr.mxu0 0.0
    %129 = vmatpush1.msra.mxu0 0.0
    %130 = vmatprep.subr.mxu0 0.0
    %131 = vmatpush1.msra.mxu0 0.0
    %132 = vmatprep.subr.mxu0 0.0
    %133 = vmatpush1.msra.mxu0 0.0
    %134 = vmatprep.subr.mxu0 0.0
    %135 = vmatpush1.msra.mxu0 0.0
    %136 = vmatprep.mubr.f32.mxu0 0.0
    %137 = vmatmul.mubr.f32.gmra.mrb[0].mxu0 %v40
    %v138 = vpop.f32.mrb[0].mxu0
    %v139 = vadd.f32 0.0, %v138
    %v140 = vpop.f32.mrb[0].mxu0
    %141 = vmatprep.mubr.f32.mxu0 0.0
    %142 = vmatmul.mubr.f32.gmra.mrb[0].mxu0 %v41
    %v143 = vpop.f32.mrb[0].mxu0
    %v144 = vadd.f32 0.0, %v143
    %v145 = vpop.f32.mrb[0].mxu0
    %146 = vmatprep.mubr.f32.mxu0 0.0
    %147 = vmatmul.mubr.f32.gmra.mrb[0].mxu0 %v42
    %v148 = vpop.f32.mrb[0].mxu0
    %v149 = vadd.f32 0.0, %v148
    %v150 = vpop.f32.mrb[0].mxu0
    %151 = vmatprep.mubr.f32.mxu0 0.0
    %152 = vmatmul.mubr.f32.gmra.mrb[0].mxu0 %v43
    %v153 = vpop.f32.mrb[0].mxu0
    %v154 = vadd.f32 0.0, %v153
    %v155 = vpop.f32.mrb[0].mxu0
    %156 = vmatprep.mubr.f32.mxu0 0.0
    %157 = vmatmul.mubr.f32.gmra.mrb[0].mxu0 %v44
    %v158 = vpop.f32.mrb[0].mxu0
    %v159 = vadd.f32 0.0, %v158
    %v160 = vpop.f32.mrb[0].mxu0
    %161 = vmatprep.mubr.f32.mxu0 0.0
    %162 = vmatmul.mubr.f32.gmra.mrb[0].mxu0 %v45
    %v163 = vpop.f32.mrb[0].mxu0
    %v164 = vadd.f32 0.0, %v163
    %v165 = vpop.f32.mrb[0].mxu0
    %166 = vmatprep.mubr.f32.mxu0 0.0
    %167 = vmatmul.mubr.f32.gmra.mrb[0].mxu0 %v46
    %v168 = vpop.f32.mrb[0].mxu0
    %v169 = vadd.f32 0.0, %v168
    %v170 = vpop.f32.mrb[0].mxu0
    %171 = vmatprep.mubr.f32.mxu0 0.0
    %172 = vmatmul.mubr.f32.gmra.mrb[0].mxu0 %v47
    %v173 = vpop.f32.mrb[0].mxu0
    %v174 = vadd.f32 0.0, %v173
    %v175 = vpop.f32.mrb[0].mxu0
    %176 = vmatprep.mubr.f32.mxu0 0.0
    %177 = vmatmul.mubr.f32.gmra.mrb[0].mxu0 %v48
    %v178 = vpop.f32.mrb[0].mxu0
    %v179 = vadd.f32 0.0, %v178
    %v180 = vpop.f32.mrb[0].mxu0
    %181 = vmatprep.mubr.f32.mxu0 0.0
    %182 = vmatmul.mubr.f32.gmra.mrb[0].mxu0 %v49
    %v183 = vpop.f32.mrb[0].mxu0
    %v184 = vadd.f32 0.0, %v183
    %v185 = vpop.f32.mrb[0].mxu0
    %186 = vmatprep.mubr.f32.mxu0 0.0
    %187 = vmatmul.mubr.f32.gmra.mrb[0].mxu0 %v50
    %v188 = vpop.f32.mrb[0].mxu0
    %v189 = vadd.f32 0.0, %v188
    %v190 = vpop.f32.mrb[0].mxu0
    %191 = vmatprep.mubr.f32.mxu0 0.0
    %192 = vmatmul.mubr.f32.gmra.mrb[0].mxu0 %v51
    %v193 = vpop.f32.mrb[0].mxu0
    %v194 = vadd.f32 0.0, %v193
    %v195 = vpop.f32.mrb[0].mxu0
    %196 = vmatprep.mubr.f32.mxu0 0.0
    %197 = vmatmul.mubr.f32.gmra.mrb[0].mxu0 %v52
    %v198 = vpop.f32.mrb[0].mxu0
    %v199 = vadd.f32 0.0, %v198
    %v200 = vpop.f32.mrb[0].mxu0
    %201 = vmatprep.mubr.f32.mxu0 0.0
    %202 = vmatmul.mubr.f32.gmra.mrb[0].mxu0 %v53
    %v203 = vpop.f32.mrb[0].mxu0
    %v204 = vadd.f32 0.0, %v203
    %v205 = vpop.f32.mrb[0].mxu0
    %206 = vmatprep.mubr.f32.mxu0 0.0
    %207 = vmatmul.mubr.f32.gmra.mrb[0].mxu0 %v54
    %v208 = vpop.f32.mrb[0].mxu0
    %v209 = vadd.f32 0.0, %v208
    %v210 = vpop.f32.mrb[0].mxu0
    %211 = vmatprep.mubr.f32.mxu0 0.0
    %212 = vmatmul.mubr.f32.gmra.mrb[0].mxu0 %v55
    %v213 = vpop.f32.mrb[0].mxu0
    %v214 = vadd.f32 0.0, %v213
    %v215 = vpop.f32.mrb[0].mxu0
    %216 = vdwg.mxu0
    %v217 = vpack.c.bf16 %v144, %v139
    %v218 = vpack.c.bf16 %v154, %v149
    %v219 = vpack.c.bf16 %v164, %v159
    %v220 = vpack.c.bf16 %v174, %v169
    %v221 = vpack.c.bf16 %v184, %v179
    %v222 = vpack.c.bf16 %v194, %v189
    %v223 = vpack.c.bf16 %v204, %v199
    %v224 = vpack.c.bf16 %v214, %v209
    %v233 = vunpack.c.l.b16 %v217
    %v234 = vunpack.c.h.b16 %v217
    %v235 = vunpack.c.l.b16 %v218
    %v236 = vunpack.c.h.b16 %v218
    %v237 = vunpack.c.l.b16 %v219
    %v238 = vunpack.c.h.b16 %v219
    %v239 = vunpack.c.l.b16 %v220
    %v240 = vunpack.c.h.b16 %v220
    %v241 = vunpack.c.l.b16 %v221
    %v242 = vunpack.c.h.b16 %v221
    %v243 = vunpack.c.l.b16 %v222
    %v244 = vunpack.c.h.b16 %v222
    %v245 = vunpack.c.l.b16 %v223
    %v246 = vunpack.c.h.b16 %v223
    %v247 = vunpack.c.l.b16 %v224
    %v248 = vunpack.c.h.b16 %v224
    %v249 = vpack.c.b16 %v233, %v233
    %v250 = vpack.c.b16 %v234, %v234
    %v251 = vpack.c.b16 %v235, %v235
    %v252 = vpack.c.b16 %v236, %v236
    %v253 = vpack.c.b16 %v237, %v237
    %v254 = vpack.c.b16 %v238, %v238
    %v255 = vpack.c.b16 %v239, %v239
    %v256 = vpack.c.b16 %v240, %v240
    %v257 = vpack.c.b16 %v241, %v241
    %v258 = vpack.c.b16 %v242, %v242
    %v259 = vpack.c.b16 %v243, %v243
    %v260 = vpack.c.b16 %v244, %v244
    %v261 = vpack.c.b16 %v245, %v245
    %v262 = vpack.c.b16 %v246, %v246
    %v263 = vpack.c.b16 %v247, %v247
    %v264 = vpack.c.b16 %v248, %v248
    %281 = vst [vmem:[#allocation7] sm:$0xf] %v249
    %282 = vst [vmem:[#allocation7 + $0x4] sm:$0xf] %v250
    %283 = vst [vmem:[#allocation7 + $0x8] sm:$0xf] %v251
    %284 = vst [vmem:[#allocation7 + $0xc] sm:$0xf] %v252
    %285 = vst [vmem:[#allocation7 + $0x10] sm:$0xf] %v253
    %286 = vst [vmem:[#allocation7 + $0x14] sm:$0xf] %v254
    %287 = vst [vmem:[#allocation7 + $0x18] sm:$0xf] %v255
    %288 = vst [vmem:[#allocation7 + $0x1c] sm:$0xf] %v256
    %289 = vst [vmem:[#allocation7 + $0x20] sm:$0xf] %v257
    %290 = vst [vmem:[#allocation7 + $0x24] sm:$0xf] %v258
    %291 = vst [vmem:[#allocation7 + $0x28] sm:$0xf] %v259
    %292 = vst [vmem:[#allocation7 + $0x2c] sm:$0xf] %v260
    %293 = vst [vmem:[#allocation7 + $0x30] sm:$0xf] %v261
    %294 = vst [vmem:[#allocation7 + $0x34] sm:$0xf] %v262
    %295 = vst [vmem:[#allocation7 + $0x38] sm:$0xf] %v263
    %296 = vst [vmem:[#allocation7 + $0x3c] sm:$0xf] %v264
    // Predicated region
    $region18: #{tpu_custom_call.1} parent=1 // pred_check
      _
    $region19: #{tpu_custom_call.1} parent=1 // pred_check_branch
      %298 = sbr.rel (0) target = $region21
    $region20: #{tpu_custom_call.1} parent=1 // pred_region
      %s300 = ssub.s32 1024, 1024
      %301 = vsyncadd [#allocation4], %s300
      %s302 = sshll.u32 [#allocation7], 4
      %s303 = int_to_ptr.vmem [resolvable:$true] %s302
      %308 = dma.vmem_to_hbm [thread:$0]  %s303, 1024, %s2, [#allocation4], 64, 64, 4
    $region21: #{tpu_custom_call.1} parent=1 // pred_fallthru
      _
    // Predicated region
    $region22: #{tpu_custom_call.1} parent=1 // pred_check
      _
    $region23: #{tpu_custom_call.1} parent=1 // pred_check_branch
      %310 = sbr.rel (0) target = $region25
    $region24: #{tpu_custom_call.1} parent=1 // pred_region
      %311 = dma.done [#allocation4], 1024
    $region25: #{tpu_custom_call.1} parent=1 // pred_fallthru
      _
    %312 = vsyncpa [#allocation3], 1
    %313 = vsyncpa [#allocation6], 1
    %314 = vsyncpa [#allocation4], 1

</llo_original>
